<compile_context>
chip_gen: v7x
topology: tpu7x:2x2x1
jax: 0.10.0
libtpu: 0.0.40
codegen_flags: <defaults>
</compile_context>

<pallas_src>
import jax
import jax.numpy as jnp
from jax.experimental import pallas as pl
from jax.experimental.pallas import tpu as pltpu


def _round_up(x, m):
    return (x + m - 1) // m * m


def _unnorm_sse_kernel(pred_ref, target_ref, std_ref, out_ref, acc_ref):
    """Accumulates sum(((pred - target) * std)^2) per row block.

    grid = (row_blocks [parallel], lane_blocks [arbitrary / reduction, innermost]).
    out_ref: (TR, 1) per-row partial sums, written only at the last lane step.
    acc_ref: (TR, TL) f32 scratch accumulator (persists across lane steps).
    """
    j = pl.program_id(1)

    @pl.when(j == 0)
    def _():
        acc_ref[...] = jnp.zeros_like(acc_ref)

    # Mean cancels in the difference; std is a (TR, 1) column lane-broadcast.
    d = (pred_ref[...].astype(jnp.float32)
         - target_ref[...].astype(jnp.float32)) * std_ref[...]
    acc_ref[...] += d * d  # pure VPU work each step; overlaps cleanly with DMA

    @pl.when(j == pl.num_programs(1) - 1)
    def _():
        # One cross-lane reduce per row block, only at the end.
        out_ref[...] = jnp.sum(acc_ref[...], axis=1, keepdims=True)


def unnormalized_mse_loss(pred, target, mean_c, std_c, *,
                          lane_tile=2048, row_tile=128):
    """pred/target: [B, C, H, W]; mean_c/std_c: per-channel stats of shape [C].

    mean_c is accepted for API parity with GaussianNormalizeDecoder but is not
    needed by the kernel (it cancels exactly in the MSE difference).
    """
    del mean_c  # cancels: (p*std+mean) - (t*std+mean) = (p-t)*std
    B, C, H, W = pred.shape
    R, L = B * C, H * W
    total_elems = R * L

    # Flatten NCHW -> [B*C, H*W]; per-channel std -> [B*C, 1] column.
    pred2 = pred.reshape(R, L)
    target2 = target.reshape(R, L)
    std2 = jnp.broadcast_to(std_c.astype(jnp.float32)[None, :], (B, C)).reshape(R, 1)

    # Tile sizes aligned to (8, 128) and clamped to the (padded) array extents.
    row_tile = _round_up(max(int(row_tile), 8), 8)
    lane_tile = _round_up(max(int(lane_tile), 128), 128)
    TR = min(row_tile, _round_up(R, 8))
    TL = min(lane_tile, _round_up(L, 128))
    Rp = _round_up(R, TR)
    Lp = _round_up(L, TL)

    # Zero-pad to tile multiples; padded entries give (0-0)*std = 0 -> no effect on the sum.
    if Rp != R or Lp != L:
        pred2 = jnp.pad(pred2, ((0, Rp - R), (0, Lp - L)))
        target2 = jnp.pad(target2, ((0, Rp - R), (0, Lp - L)))
        std2 = jnp.pad(std2, ((0, Rp - R), (0, 0)))

    grid = (Rp // TR, Lp // TL)

    # Explicit VMEM budget: pred+target double-buffered blocks + f32 accumulator + slack.
    in_itemsize = jnp.dtype(pred2.dtype).itemsize
    vmem_bytes = (2 * 2 * TR * TL * in_itemsize   # 2 inputs x 2 pipeline buffers
                  + TR * TL * 4                   # accumulator scratch (f32)
                  + (2 << 20))                    # std/out blocks + bookkeeping slack
    vmem_limit_bytes = max(vmem_bytes, 32 * 1024 * 1024)

    row_sums = pl.pallas_call(
        _unnorm_sse_kernel,
        out_shape=jax.ShapeDtypeStruct((Rp, 1), jnp.float32),
        grid_spec=pltpu.PrefetchScalarGridSpec(
            num_scalar_prefetch=0,
            grid=grid,
            in_specs=[
                pl.BlockSpec((TR, TL), lambda i, j: (i, j)),   # pred tile
                pl.BlockSpec((TR, TL), lambda i, j: (i, j)),   # target tile
                pl.BlockSpec((TR, 1), lambda i, j: (i, 0)),    # std column (per row block)
            ],
            out_specs=pl.BlockSpec((TR, 1), lambda i, j: (i, 0)),
            scratch_shapes=[pltpu.VMEM((TR, TL), jnp.float32)],
        ),
        compiler_params=pltpu.CompilerParams(
            dimension_semantics=("parallel", "arbitrary"),  # rows shard on megacore; lanes reduce
            vmem_limit_bytes=vmem_limit_bytes,
        ),
    )(pred2, target2, std2)

    # Tiny final reduction + mean normalization in plain JAX.
    return jnp.sum(row_sums) / jnp.float32(total_elems)


def reference_loss(pred, target, mean_c, std_c):
    """Pure-JAX reference with the full un-normalization (including mean)."""
    mean = mean_c.reshape(1, -1, 1, 1)
    std = std_c.reshape(1, -1, 1, 1)
    p = pred * std + mean
    t = target * std + mean
    return jnp.mean((p - t) ** 2)


if __name__ == "__main__":
    # Primary case: matches the module's typical NCHW usage.
    B, C, H, W = 2, 4, 16, 16
    key = jax.random.PRNGKey(0)
    k1, k2 = jax.random.split(key)
    pred = jax.random.normal(k1, (B, C, H, W), dtype=jnp.float32)
    target = jax.random.normal(k2, (B, C, H, W), dtype=jnp.float32)

    # Non-trivial deterministic decoder stats (as if installed via set_norm_decoder).
    mean_c = jnp.arange(C, dtype=jnp.float32) * 0.1
    std_c = 0.5 + 0.25 * jnp.arange(C, dtype=jnp.float32)

    loss = jax.block_until_ready(unnormalized_mse_loss(pred, target, mean_c, std_c))
    ref = reference_loss(pred, target, mean_c, std_c)
    assert jnp.allclose(loss, ref, rtol=1e-5, atol=1e-6), (loss, ref)

    # Secondary case: non-divisible shapes exercising padding, a multi-step lane
    # reduction, and multiple parallel row blocks.
    B2, C2, H2, W2 = 3, 6, 10, 20
    k3, k4 = jax.random.split(k2)
    p2 = jax.random.normal(k3, (B2, C2, H2, W2), dtype=jnp.float32)
    t2 = jax.random.normal(k4, (B2, C2, H2, W2), dtype=jnp.float32)
    m2 = jnp.linspace(-1.0, 1.0, C2, dtype=jnp.float32)
    s2 = jnp.linspace(0.5, 1.5, C2, dtype=jnp.float32)
    loss2 = jax.block_until_ready(
        unnormalized_mse_loss(p2, t2, m2, s2, lane_tile=128, row_tile=8))
    ref2 = reference_loss(p2, t2, m2, s2)
    assert jnp.allclose(loss2, ref2, rtol=1e-5, atol=1e-6), (loss2, ref2)

    # TODO(synk): the torch module accepts an arbitrary `loss` callable; only the
    # default GaussianNormalizeDecoder + MSELoss pairing is fused here.
    print("KERNEL_OK")
</pallas_src>

<mosaic_0001>
module attributes {stable_mosaic.version = 11 : i64} {
  func.func @_unnorm_sse_kernel(%arg0: i32, %arg1: i32, %arg2: memref<8x256xf32, #tpu.memory_space<vmem>>, %arg3: memref<8x256xf32, #tpu.memory_space<vmem>>, %arg4: memref<8x1xf32, #tpu.memory_space<vmem>>, %arg5: memref<8x1xf32, #tpu.memory_space<vmem>>, %arg6: memref<8x256xf32, #tpu.memory_space<vmem>>) attributes {dimension_semantics = [#tpu.dimension_semantics<parallel>, #tpu.dimension_semantics<arbitrary>], iteration_bounds = array<i64: 1, 1>, scalar_prefetch = 0 : i64, scratch_operands = 1 : i64, tpu.core_type = #tpu.core_type<tc>, window_params = [{transform_indices = @transform_0, window_bounds = array<i64: 8, 256>}, {transform_indices = @transform_1, window_bounds = array<i64: 8, 256>}, {transform_indices = @transform_2, window_bounds = array<i64: 8, 1>}, {transform_indices = @transform_3, window_bounds = array<i64: 8, 1>}]} {
    %c0_i32 = arith.constant 0 : i32
    %0 = arith.cmpi eq, %arg1, %c0_i32 : i32
    %1 = arith.extui %0 : i1 to i32
    %c0_i32_0 = arith.constant 0 : i32
    %2 = arith.cmpi ne, %1, %c0_i32_0 : i32
    scf.if %2 {
      %cst = arith.constant 0.000000e+00 : f32
      %16 = vector.broadcast %cst : f32 to vector<8x256xf32>
      %c0_12 = arith.constant 0 : index
      %c0_13 = arith.constant 0 : index
      %17 = vector.load %arg6[%c0_12, %c0_13] : memref<8x256xf32, #tpu.memory_space<vmem>>, vector<8x256xf32>
      tpu.vector_store %arg6[%c0_12, %c0_13], %16 {strides = array<i32>} : memref<8x256xf32, #tpu.memory_space<vmem>>, vector<8x256xf32>,
    } else {
    }
    %c0 = arith.constant 0 : index
    %c0_1 = arith.constant 0 : index
    %3 = vector.load %arg2[%c0, %c0_1] : memref<8x256xf32, #tpu.memory_space<vmem>>, vector<8x256xf32>
    %c0_2 = arith.constant 0 : index
    %c0_3 = arith.constant 0 : index
    %4 = vector.load %arg3[%c0_2, %c0_3] : memref<8x256xf32, #tpu.memory_space<vmem>>, vector<8x256xf32>
    %5 = arith.subf %3, %4 : vector<8x256xf32>
    %c0_4 = arith.constant 0 : index
    %c0_5 = arith.constant 0 : index
    %6 = vector.load %arg4[%c0_4, %c0_5] : memref<8x1xf32, #tpu.memory_space<vmem>>, vector<8x1xf32>
    %7 = vector.broadcast %6 : vector<8x1xf32> to vector<8x256xf32>
    %8 = arith.mulf %5, %7 : vector<8x256xf32>
    %c0_6 = arith.constant 0 : index
    %c0_7 = arith.constant 0 : index
    %9 = vector.load %arg6[%c0_6, %c0_7] : memref<8x256xf32, #tpu.memory_space<vmem>>, vector<8x256xf32>
    %10 = arith.mulf %8, %8 : vector<8x256xf32>
    %11 = arith.addf %9, %10 : vector<8x256xf32>
    %c0_8 = arith.constant 0 : index
    %c0_9 = arith.constant 0 : index
    %12 = vector.load %arg6[%c0_8, %c0_9] : memref<8x256xf32, #tpu.memory_space<vmem>>, vector<8x256xf32>
    tpu.vector_store %arg6[%c0_8, %c0_9], %11 {strides = array<i32>} : memref<8x256xf32, #tpu.memory_space<vmem>>, vector<8x256xf32>,
    %c0_i32_10 = arith.constant 0 : i32
    %13 = arith.cmpi eq, %arg1, %c0_i32_10 : i32
    %14 = arith.extui %13 : i1 to i32
    %c0_i32_11 = arith.constant 0 : i32
    %15 = arith.cmpi ne, %14, %c0_i32_11 : i32
    scf.if %15 {
      %c0_12 = arith.constant 0 : index
      %c0_13 = arith.constant 0 : index
      %16 = vector.load %arg6[%c0_12, %c0_13] : memref<8x256xf32, #tpu.memory_space<vmem>>, vector<8x256xf32>
      %cst = arith.constant dense<0.000000e+00> : vector<8xf32>
      %17 = vector.multi_reduction <add>, %16, %cst [1] : vector<8x256xf32> to vector<8xf32>
      %18 = vector.shape_cast %17 : vector<8xf32> to vector<8x1xf32>
      %c0_14 = arith.constant 0 : index
      %c0_15 = arith.constant 0 : index
      %19 = vector.load %arg5[%c0_14, %c0_15] : memref<8x1xf32, #tpu.memory_space<vmem>>, vector<8x1xf32>
      tpu.vector_store %arg5[%c0_14, %c0_15], %18 {strides = array<i32>} : memref<8x1xf32, #tpu.memory_space<vmem>>, vector<8x1xf32>,
    } else {
    }
    return
  }
  func.func @transform_0(%arg0: i32, %arg1: i32) -> (i32, i32) {
    %c0_i32 = arith.constant 0 : i32
    return %arg0, %arg1 : i32, i32
  }
  func.func @transform_1(%arg0: i32, %arg1: i32) -> (i32, i32) {
    %c0_i32 = arith.constant 0 : i32
    return %arg0, %arg1 : i32, i32
  }
  func.func @transform_2(%arg0: i32, %arg1: i32) -> (i32, i32) {
    %c0_i32 = arith.constant 0 : i32
    %c0_i32_0 = arith.constant 0 : i32
    return %arg0, %c0_i32 : i32, i32
  }
  func.func @transform_3(%arg0: i32, %arg1: i32) -> (i32, i32) {
    %c0_i32 = arith.constant 0 : i32
    %c0_i32_0 = arith.constant 0 : i32
    return %arg0, %c0_i32 : i32, i32
  }
}

</mosaic_0001>

<llo_original>
// kernel: tpu_custom_call.1
$region0: #{tpu_custom_call.1}
  #allocation0 [shape = 'u32[]', space=smem, size = 0x4, offset = 0x4, fixed_abs, tag = 'smem constant byte address 0x4 - core index']
  #allocation1 [shape = 'u32[144,128]{1,0:T(1,128)}', space=vmem, size = 0x12000, scoped, tag = 'internal scratch']
  #allocation2 [shape = 'f32[8,256]{1,0:T(8,128)}', space=vmem, size = 0x2000, scoped, tag = 'scratch operand']
  %s0 = inlined_call_operand.hbm [shape: f32[8,256], index: 0, kind: input, shape index: {}]
  %s1 = inlined_call_operand.hbm [shape: f32[8,256], index: 1, kind: input, shape index: {}]
  %s2 = inlined_call_operand.vmem [shape: f32[8,1], index: 2, kind: input, shape index: {}]
  %s3 = inlined_call_operand.vmem [shape: f32[8,1], index: 3, kind: output, shape index: {}]
  %s4 = sld [smem:[#allocation0]]
  $region38: #{tpu_custom_call.1} parent=0
    _
  %s6 = ssub.s32 1, %s4
  %s7 = scalar_select 0, %s6, %s4
  $region1: #{tpu_custom_call.1} parent=0
    #allocation3 [shape = 'u8[8192]{0}', space=vmem, size = 0x2000, scoped, tag = 'input window, operand 0, single buffered']
    #allocation4 [shape = 's32[1]{0}', space=sflag, size = 0x4, scoped, tag = 'scoped memory for tpu_custom_call.1']
    #allocation5 [shape = 'u8[8192]{0}', space=vmem, size = 0x2000, scoped, tag = 'input window, operand 1, single buffered']
    #allocation6 [shape = 's32[1]{0}', space=sflag, size = 0x4, scoped, tag = 'scoped memory for tpu_custom_call.1']
    %8 = vsyncpa [#allocation4], 0
    %9 = vsyncpa [#allocation6], 0
    // Predicated region
    $region2: #{tpu_custom_call.1} parent=1 // pred_check
      _
    $region3: #{tpu_custom_call.1} parent=1 // pred_check_branch
      %11 = sbr.rel (0) target = $region5
    $region4: #{tpu_custom_call.1} parent=1 // pred_region
      %s13 = ssub.s32 256, 256
      %14 = vsyncadd [#allocation4], %s13
      %s16 = sshll.u32 [#allocation3], 4
      %s17 = int_to_ptr.vmem [resolvable:$true] %s16
      %19 = dma.hbm_to_vmem [thread:$0]  %s0, 256, %s17, [#allocation4]
    $region5: #{tpu_custom_call.1} parent=1 // pred_fallthru
      _
    // Predicated region
    $region6: #{tpu_custom_call.1} parent=1 // pred_check
      _
    $region7: #{tpu_custom_call.1} parent=1 // pred_check_branch
      %21 = sbr.rel (0) target = $region9
    $region8: #{tpu_custom_call.1} parent=1 // pred_region
      %s23 = ssub.s32 256, 256
      %24 = vsyncadd [#allocation6], %s23
      %s26 = sshll.u32 [#allocation5], 4
      %s27 = int_to_ptr.vmem [resolvable:$true] %s26
      %29 = dma.hbm_to_vmem [thread:$0]  %s1, 256, %s27, [#allocation6]
    $region9: #{tpu_custom_call.1} parent=1 // pred_fallthru
      _
    // Predicated region
    $region10: #{tpu_custom_call.1} parent=1 // pred_check
      _
    $region11: #{tpu_custom_call.1} parent=1 // pred_check_branch
      %31 = sbr.rel (0) target = $region13
    $region12: #{tpu_custom_call.1} parent=1 // pred_region
      _
    $region13: #{tpu_custom_call.1} parent=1 // pred_fallthru
      _
    // Predicated region
    $region14: #{tpu_custom_call.1} parent=1 // pred_check
      _
    $region15: #{tpu_custom_call.1} parent=1 // pred_check_branch
      %33 = sbr.rel (0) target = $region17
    $region16: #{tpu_custom_call.1} parent=1 // pred_region
      %34 = dma.done [#allocation4], 256
    $region17: #{tpu_custom_call.1} parent=1 // pred_fallthru
      _
    // Predicated region
    $region18: #{tpu_custom_call.1} parent=1 // pred_check
      _
    $region19: #{tpu_custom_call.1} parent=1 // pred_check_branch
      %36 = sbr.rel (0) target = $region21
    $region20: #{tpu_custom_call.1} parent=1 // pred_region
      %37 = dma.done [#allocation6], 256
    $region21: #{tpu_custom_call.1} parent=1 // pred_fallthru
      _
    %p38 = scmp.eq.s32.totalorder 0, 0
    // Predicated region
    $region22: #{tpu_custom_call.1} parent=1 // pred_check
      %p39 = pneg %p38
    $region23: #{tpu_custom_call.1} parent=1 // pred_check_branch
      %41 = sbr.rel (%p39) target = $region25
    $region24: #{tpu_custom_call.1} parent=1 // pred_region
      %42 = vst [vmem:[#allocation2] sm:$0xff] 0.0
      %43 = vst [vmem:[#allocation2 + $0x8] sm:$0xff] 0.0
    $region25: #{tpu_custom_call.1} parent=1 // pred_fallthru
      _
    %v44 = vld [vmem:[#allocation3] sm:$0xff]
    %v45 = vld [vmem:[#allocation3 + $0x8] sm:$0xff]
    %v46 = vld [vmem:[#allocation5] sm:$0xff]
    %v47 = vld [vmem:[#allocation5 + $0x8] sm:$0xff]
    %v48 = vsub.f32 %v44, %v46
    %v49 = vsub.f32 %v45, %v47
    %v50 = vld [vmem:[%s2] sm:$0xff]
    %52 = vset.pattern.permute.xlu0 0
    %53 = vperm.xlu0 %52, %v50
    %v54 = vpop.permute.xlu0 %53
    %v56 = vmul.f32 %v48, %v54
    %v57 = vmul.f32 %v49, %v54
    %v58 = vld [vmem:[#allocation2] sm:$0xff]
    %v59 = vld [vmem:[#allocation2 + $0x8] sm:$0xff]
    %v60 = vmul.f32 %v56, %v56
    %v61 = vmul.f32 %v57, %v57
    %v62 = vadd.f32 %v58, %v60
    %v63 = vadd.f32 %v59, %v61
    %64 = vst [vmem:[#allocation2] sm:$0xff] %v62
    %65 = vst [vmem:[#allocation2 + $0x8] sm:$0xff] %v63
    // Predicated region
    $region26: #{tpu_custom_call.1} parent=1 // pred_check
      %p66 = pneg %p38
    $region27: #{tpu_custom_call.1} parent=1 // pred_check_branch
      %68 = sbr.rel (%p66) target = $region29
    $region28: #{tpu_custom_call.1} parent=1 // pred_region
      %v69 = vld [vmem:[#allocation2] sm:$0xff]
      %v70 = vld [vmem:[#allocation2 + $0x8] sm:$0xff]
      %v71 = vadd.f32 %v69, %v70
      %72 = vadd.xlane.f32.xlu0 %v71
      %v73 = vpop.xlane.xlu0 %72
      %vm74 = vcmask 7168
      %75 = vst.msk [vmem:[%s3] sm:$0xff] %vm74, %v73
    $region29: #{tpu_custom_call.1} parent=1 // pred_fallthru
      _
    // Predicated region
    $region30: #{tpu_custom_call.1} parent=1 // pred_check
      _
    $region31: #{tpu_custom_call.1} parent=1 // pred_check_branch
      %77 = sbr.rel (0) target = $region33
    $region32: #{tpu_custom_call.1} parent=1 // pred_region
      _
    $region33: #{tpu_custom_call.1} parent=1 // pred_fallthru
      _
    // Predicated region
    $region34: #{tpu_custom_call.1} parent=1 // pred_check
      _
    $region35: #{tpu_custom_call.1} parent=1 // pred_check_branch
      %79 = sbr.rel (0) target = $region37
    $region36: #{tpu_custom_call.1} parent=1 // pred_region
      _
    $region37: #{tpu_custom_call.1} parent=1 // pred_fallthru
      _
    %80 = vsyncpa [#allocation4], 1
    %81 = vsyncpa [#allocation6], 1

</llo_original>
